<compile_context>
chip_gen: v7x
topology: tpu7x:2x2x1
jax: 0.10.0
libtpu: 0.0.40
codegen_flags: <defaults>
</compile_context>

<pallas_src>
import functools
import math

import jax
import jax.numpy as jnp
from jax import lax
from jax.experimental import pallas as pl
from jax.experimental.pallas import tpu as pltpu

ROW_TILE = 512
LANE = 128
VMEM_LIMIT = 32 * 1024 * 1024  # valid on v5e/v6e (128 MiB phys) and v7x (64 MiB)


def _round_up(x, m):
    return ((x + m - 1) // m) * m


def _num_tensorcores():
    """2 TensorCores on megacore parts (v7x/v4/v3); v5e/v6e have 1."""
    try:
        kind = jax.devices()[0].device_kind.lower()
        if "v7" in kind or "tpu7" in kind or "v4" in kind or "v3" in kind:
            return 2
    except Exception:
        pass
    return 1


def _row_tile(m):
    """Single max-size tile on single-TC chips / tiny M; split only for megacore."""
    tm = min(ROW_TILE, _round_up(m, 8))
    if _num_tensorcores() > 1 and m >= 512 and pl.cdiv(m, tm) < 2:
        tm = _round_up(pl.cdiv(m, 2), 8)
    return tm


# ---------------- fused backbone 1x1 conv + input_proj (channel-major) -------

def _backbone_proj_kernel(x_ref, w1t_ref, b1_ref, w2t_ref, b2_ref, o_ref):
    # channel-major: y = W2^T @ relu(W1^T @ x + b1) + b2, all NN matmuls.
    x = x_ref[0].astype(jnp.bfloat16)                     # (C, tl)
    h = jnp.dot(w1t_ref[...], x, preferred_element_type=jnp.float32) + b1_ref[...]
    h = jnp.maximum(h, 0.0).astype(jnp.bfloat16)          # f32 ReLU (v5e-safe)
    y = jnp.dot(w2t_ref[...], h, preferred_element_type=jnp.float32) + b2_ref[...]
    o_ref[0] = y.astype(o_ref.dtype)


def fused_backbone_input_proj(feats_cm, w1, b1, w2, b2):
    """(B, C, L) channel-major features -> (B, D, L) bf16 memory, no transposes."""
    B, C, L = feats_cm.shape
    Cmid = w1.shape[1]
    Dm = w2.shape[1]
    tl = L if L <= 512 else 512
    return pl.pallas_call(
        _backbone_proj_kernel,
        out_shape=jax.ShapeDtypeStruct((B, Dm, L), jnp.bfloat16),
        grid=(B, pl.cdiv(L, tl)),
        in_specs=[
            pl.BlockSpec((1, C, tl), lambda b, i: (b, 0, i)),
            pl.BlockSpec((Cmid, C), lambda b, i: (0, 0)),
            pl.BlockSpec((Cmid, 1), lambda b, i: (0, 0)),
            pl.BlockSpec((Dm, Cmid), lambda b, i: (0, 0)),
            pl.BlockSpec((Dm, 1), lambda b, i: (0, 0)),
        ],
        out_specs=pl.BlockSpec((1, Dm, tl), lambda b, i: (b, 0, i)),
        compiler_params=pltpu.CompilerParams(
            dimension_semantics=("parallel", "parallel")),
    )(feats_cm,
      w1.T.astype(jnp.bfloat16), b1.reshape(-1, 1).astype(jnp.float32),
      w2.T.astype(jnp.bfloat16), b2.reshape(-1, 1).astype(jnp.float32))


# ------------------- cross-attention (flash-style KV tiling) -----------------

def _cross_attention_kernel(q_ref, kv_ref, o_ref, m_sc, l_sc, acc_sc, *, scale):
    li = pl.program_id(1)

    @pl.when(li == 0)
    def _():
        m_sc[...] = jnp.full_like(m_sc, -jnp.inf)
        l_sc[...] = jnp.zeros_like(l_sc)
        acc_sc[...] = jnp.zeros_like(acc_sc)

    q = q_ref[...]                           # (Q, D) bf16
    kv = kv_ref[0]                           # (D, tl) bf16 -- shared K and V
    # channel-major memory => QK^T is a plain NN matmul (no transposed operand).
    s = jnp.dot(q, kv, preferred_element_type=jnp.float32) * scale      # (Q, tl)
    m_prev = m_sc[...]
    m_new = jnp.maximum(m_prev, jnp.max(s, axis=-1, keepdims=True))
    alpha = jnp.exp(m_prev - m_new)          # f32 exp (v5e-safe)
    p = jnp.exp(s - m_new)
    l_sc[...] = alpha * l_sc[...] + jnp.sum(p, axis=-1, keepdims=True)
    pv = lax.dot_general(p.astype(jnp.bfloat16), kv, (((1,), (1,)), ((), ())),
                         preferred_element_type=jnp.float32)            # (Q, D)
    acc_sc[...] = alpha * acc_sc[...] + pv
    m_sc[...] = m_new

    @pl.when(li == pl.num_programs(1) - 1)
    def _():
        o_ref[0] = (acc_sc[...] * pl.reciprocal(l_sc[...], approx=True)
                    ).astype(o_ref.dtype)


def pallas_cross_attention(q, memory_cm):
    """Single-head cross-attention: queries (Q, D) attend to memory (B, D, L)."""
    Qn, Dm = q.shape
    B, _, L = memory_cm.shape
    tl = L if L <= 512 else 512
    return pl.pallas_call(
        functools.partial(_cross_attention_kernel, scale=1.0 / math.sqrt(Dm)),
        out_shape=jax.ShapeDtypeStruct((B, Qn, Dm), jnp.bfloat16),
        grid=(B, pl.cdiv(L, tl)),
        in_specs=[
            pl.BlockSpec((Qn, Dm), lambda b, i: (0, 0)),
            pl.BlockSpec((1, Dm, tl), lambda b, i: (b, 0, i)),
        ],
        out_specs=pl.BlockSpec((1, Qn, Dm), lambda b, i: (b, 0, 0)),
        scratch_shapes=[pltpu.VMEM((Qn, 1), jnp.float32),
                        pltpu.VMEM((Qn, 1), jnp.float32),
                        pltpu.VMEM((Qn, Dm), jnp.float32)],
        compiler_params=pltpu.CompilerParams(
            dimension_semantics=("parallel", "arbitrary"),
            vmem_limit_bytes=VMEM_LIMIT),
    )(q.astype(jnp.bfloat16), memory_cm)


# ------------- DETR class / bbox heads (single lane-dense output) ------------

def _detr_heads_kernel(hs_ref, w1_ref, b1_ref, w2_ref, b2_ref, w3_ref, b3_ref,
                       o_ref, *, h1_off, dh, cc):
    hs = hs_ref[...]                                              # (tm, D) bf16
    # combined matmul: lanes [0:cc] = class logits, [h1_off:h1_off+dh] = bbox h1
    h1 = jnp.dot(hs, w1_ref[...], preferred_element_type=jnp.float32) + b1_ref[...]
    hb = jnp.maximum(h1[:, h1_off:h1_off + dh], 0.0).astype(jnp.bfloat16)
    h2 = jnp.maximum(jnp.dot(hb, w2_ref[...], preferred_element_type=jnp.float32)
                     + b2_ref[...], 0.0).astype(jnp.bfloat16)
    # bbox_w3 pre-shifted so the 4 box values land at lanes [cc:cc+4].
    box = jax.nn.sigmoid(
        jnp.dot(h2, w3_ref[...], preferred_element_type=jnp.float32) + b3_ref[...])
    lane = lax.broadcasted_iota(jnp.int32, h1.shape, dimension=1)
    box_mask = (lane >= cc) & (lane < cc + 4)
    o_ref[...] = jnp.where(box_mask, box, h1)   # single lane-dense (tm,128) store


def pallas_detr_heads(hs_flat, params):
    """Fused class_embed + bbox_embed(+sigmoid); one merged 128-lane output."""
    M, Dm = hs_flat.shape
    class_w = params["class_w"]
    Cc = class_w.shape[1]
    Dh = params["bbox_w1"].shape[1]
    HEAD_OUT = 128
    H1_OFF = 64
    assert Cc + 4 <= H1_OFF and H1_OFF + Dh <= HEAD_OUT

    w1c = (jnp.zeros((Dm, HEAD_OUT), jnp.bfloat16)
           .at[:, :Cc].set(class_w.astype(jnp.bfloat16))
           .at[:, H1_OFF:H1_OFF + Dh].set(params["bbox_w1"].astype(jnp.bfloat16)))
    b1c = (jnp.zeros((1, HEAD_OUT), jnp.float32)
           .at[:, :Cc].set(params["class_b"])
           .at[:, H1_OFF:H1_OFF + Dh].set(params["bbox_b1"]))
    w3p = jnp.zeros((Dh, HEAD_OUT), jnp.bfloat16).at[:, Cc:Cc + 4].set(
        params["bbox_w3"].astype(jnp.bfloat16))
    b3p = jnp.zeros((1, HEAD_OUT), jnp.float32).at[:, Cc:Cc + 4].set(
        params["bbox_b3"])

    tm = _row_tile(M)
    out = pl.pallas_call(
        functools.partial(_detr_heads_kernel, h1_off=H1_OFF, dh=Dh, cc=Cc),
        out_shape=jax.ShapeDtypeStruct((M, HEAD_OUT), jnp.float32),
        grid=(pl.cdiv(M, tm),),
        in_specs=[
            pl.BlockSpec((tm, Dm), lambda i: (i, 0)),
            pl.BlockSpec((Dm, HEAD_OUT), lambda i: (0, 0)),
            pl.BlockSpec((1, HEAD_OUT), lambda i: (0, 0)),
            pl.BlockSpec((Dh, Dh), lambda i: (0, 0)),
            pl.BlockSpec((1, Dh), lambda i: (0, 0)),
            pl.BlockSpec((Dh, HEAD_OUT), lambda i: (0, 0)),
            pl.BlockSpec((1, HEAD_OUT), lambda i: (0, 0)),
        ],
        out_specs=pl.BlockSpec((tm, HEAD_OUT), lambda i: (i, 0)),
        compiler_params=pltpu.CompilerParams(dimension_semantics=("parallel",)),
    )(hs_flat.astype(jnp.bfloat16), w1c, b1c,
      params["bbox_w2"].astype(jnp.bfloat16),
      params["bbox_b2"].reshape(1, -1).astype(jnp.float32), w3p, b3p)
    return out[:, :Cc], out[:, Cc:Cc + 4]


# -------- pair interaction head (outer-sum, fused weight, in-kernel prior) ---

def _pair_interaction_kernel(hst_ref, hsf_ref, scr_ref, scc_ref, w_ref, b_ref,
                             o_ref, *, a_pad, single_tile):
    if single_tile:
        # single combined (D, 2*A_pad) MXU push on the shared LHS.
        u = jnp.dot(hst_ref[0], w_ref[...], preferred_element_type=jnp.float32)
        uh = u[:, :a_pad]
        uo = u[:, a_pad:] + b_ref[...]
    else:
        w = w_ref[...]
        uh = jnp.dot(hst_ref[0], w[:, :a_pad],
                     preferred_element_type=jnp.float32)            # (tq, A_pad)
        uo = jnp.dot(hsf_ref[0], w[:, a_pad:],
                     preferred_element_type=jnp.float32) + b_ref[...]  # (Q, A_pad)
    # outer-sum: logits[i, j, :] = hs[i]@W_h + hs[j]@W_o + b
    logits = uh[:, None, :] + uo[None, :, :]                         # (tq, Q, A_pad)
    # prior computed on the VPU from (tq,1)/(1,Q) scores -- no HBM intermediate.
    # TODO(synk): UPT's per-action object-class validity mask and score
    # exponent (gamma) from compute_prior_scores are omitted; score_i*score_j
    # stands in for prior.prod(0).
    prior = (scr_ref[0] * scc_ref[0])[:, :, None]                    # (tq, Q, 1)
    o_ref[0] = (jax.nn.sigmoid(logits) * prior).astype(o_ref.dtype)  # f32 sigmoid


def pallas_pair_interaction(hs, obj_scores, w_h, w_o, bias, num_actions):
    """(B,Q,D) states -> dense (B, Q*Q, A) pair scores, prior fused in-kernel."""
    B, Q, Dm = hs.shape
    A_pad = _round_up(num_actions, LANE)
    tq = Q if Q <= 128 else 64           # row-tile bounds VMEM on v7x at large Q
    nq = pl.cdiv(Q, tq)

    w_combo = (jnp.zeros((Dm, 2 * A_pad), jnp.bfloat16)
               .at[:, :num_actions].set(w_h.astype(jnp.bfloat16))
               .at[:, A_pad:A_pad + num_actions].set(w_o.astype(jnp.bfloat16)))
    b_p = jnp.zeros((1, A_pad), jnp.float32).at[:, :num_actions].set(
        bias.astype(jnp.float32))
    sc_r = obj_scores[:, :, None].astype(jnp.float32)    # (B, Q, 1)
    sc_c = obj_scores[:, None, :].astype(jnp.float32)    # (B, 1, Q)
    hs_b = hs.astype(jnp.bfloat16)

    out = pl.pallas_call(
        functools.partial(_pair_interaction_kernel,
                          a_pad=A_pad, single_tile=(nq == 1)),
        out_shape=jax.ShapeDtypeStruct((B, Q, Q, A_pad), jnp.bfloat16),
        grid=(B, nq),
        in_specs=[
            pl.BlockSpec((1, tq, Dm), lambda b, i: (b, i, 0)),   # row tile
            pl.BlockSpec((1, Q, Dm), lambda b, i: (b, 0, 0)),    # full hs (cols)
            pl.BlockSpec((1, tq, 1), lambda b, i: (b, i, 0)),    # row scores
            pl.BlockSpec((1, 1, Q), lambda b, i: (b, 0, 0)),     # col scores
            pl.BlockSpec((Dm, 2 * A_pad), lambda b, i: (0, 0)),
            pl.BlockSpec((1, A_pad), lambda b, i: (0, 0)),
        ],
        out_specs=pl.BlockSpec((1, tq, Q, A_pad), lambda b, i: (b, i, 0, 0)),
        compiler_params=pltpu.CompilerParams(
            dimension_semantics=("parallel", "parallel"),
            vmem_limit_bytes=VMEM_LIMIT),
    )(hs_b, hs_b, sc_r, sc_c, w_combo, b_p)
    # TODO(synk): dense pairs include i==j; UPT filters x != y pairs downstream.
    return out[..., :num_actions].reshape(B, Q * Q, num_actions)


# ------------------------------- parameters ----------------------------------

def init_params(key, c_in=4, c_feat=8, hidden=32, num_obj_classes=16,
                num_queries=8, num_actions=8):
    ks = jax.random.split(key, 15)

    def w(k, shape, scale=0.05):
        return (scale * jax.random.normal(k, shape)).astype(jnp.float32)

    return dict(
        backbone_w=w(ks[0], (c_in, c_feat)),
        backbone_b=w(ks[1], (c_feat,)),
        input_proj_w=w(ks[2], (c_feat, hidden)),
        input_proj_b=w(ks[3], (hidden,)),
        query_embed=w(ks[4], (num_queries, hidden), 1.0),
        class_w=w(ks[5], (hidden, num_obj_classes + 1)),
        class_b=w(ks[6], (num_obj_classes + 1,)),
        bbox_w1=w(ks[7], (hidden, hidden)),
        bbox_b1=w(ks[8], (hidden,)),
        bbox_w2=w(ks[9], (hidden, hidden)),
        bbox_b2=w(ks[10], (hidden,)),
        bbox_w3=w(ks[11], (hidden, 4)),
        bbox_b3=w(ks[12], (4,)),
        inter_w=w(ks[13], (2 * hidden, num_actions)),
        inter_b=w(ks[14], (num_actions,)),
    )


# ------------------------------ forward pass ---------------------------------

def upt_forward(images, params):
    """Inference branch of UPT.forward (eval mode, no targets)."""
    B, C, H, W = images.shape
    image_sizes = jnp.tile(jnp.array([[H, W]], jnp.float32), (B, 1))

    # --- detector.backbone (stand-in) + detector.input_proj, fused -----------
    # TODO(synk): the full ResNet backbone, positional encodings and padding
    # mask are external nn.Modules; a strided 1x1-conv feature extractor
    # (fused with input_proj in one channel-major Pallas kernel) stands in.
    stride = 2
    feats = images[:, :, ::stride, ::stride]                      # (B, C, H', W')
    Hp, Wp = feats.shape[2], feats.shape[3]
    L = Hp * Wp
    feats_cm = feats.reshape(B, C, L)                             # no transpose
    memory_cm = fused_backbone_input_proj(
        feats_cm, params["backbone_w"], params["backbone_b"],
        params["input_proj_w"], params["input_proj_b"])           # (B, D, L) bf16
    D = memory_cm.shape[1]

    # --- detector.transformer (stand-in): one cross-attention decoder --------
    # TODO(synk): DETR's multi-layer encoder/decoder is an external module;
    # a single flash-style Pallas cross-attention layer stands in (hs[-1] only).
    hs = pallas_cross_attention(params["query_embed"], memory_cm)  # (B,Q,D) bf16
    Qn = hs.shape[1]

    # --- class_embed / bbox_embed heads (fused, single merged output) --------
    logits, boxes_cxcywh = pallas_detr_heads(hs.reshape(B * Qn, D), params)
    logits = logits.reshape(B, Qn, -1)
    boxes_cxcywh = boxes_cxcywh.reshape(B, Qn, 4)

    # --- postprocessor (glue): softmax scores + cxcywh->xyxy pixel boxes ------
    probs = jax.nn.softmax(logits, axis=-1)[..., :-1]
    obj_scores = probs.max(-1)                                     # (B, Q)
    obj_labels = probs.argmax(-1)                                  # (B, Q)
    cx, cy, w_, h_ = jnp.split(boxes_cxcywh, 4, axis=-1)
    boxes_xyxy = jnp.concatenate(
        [cx - 0.5 * w_, cy - 0.5 * h_, cx + 0.5 * w_, cy + 0.5 * h_], axis=-1)
    scale_fct = jnp.stack([image_sizes[:, 1], image_sizes[:, 0],
                           image_sizes[:, 1], image_sizes[:, 0]], axis=-1)
    boxes_xyxy = boxes_xyxy * scale_fct[:, None, :]

    # TODO(synk): prepare_region_proposals (batched NMS, score thresholding,
    # min/max instance sampling) is data-dependent dynamic-shape control flow
    # with no clean Pallas equivalent; all queries are kept as proposals.

    # --- interaction head (outer-sum) + score epilogue, fused -----------------
    # pair_logits[i,j] = [hs_i ; hs_j] @ inter_w + b == hs_i@W_h + hs_j@W_o + b
    # TODO(synk): torch.nonzero gather of surviving pairs is dynamic-shape;
    # the dense per-(pair, action) score tensor is returned instead.
    A = params["inter_b"].shape[0]
    w_h = params["inter_w"][:D]
    w_o = params["inter_w"][D:]
    pair_scores = pallas_pair_interaction(hs, obj_scores, w_h, w_o,
                                          params["inter_b"], A)    # (B,Q*Q,A)

    h_idx = jnp.repeat(jnp.arange(Qn), Qn)
    o_idx = jnp.tile(jnp.arange(Qn), Qn)

    detections = []
    for b in range(B):
        detections.append(dict(
            boxes=boxes_xyxy[b],
            pairing=jnp.stack([h_idx, o_idx]),
            scores=pair_scores[b],
            labels=obj_labels[b],
            objects=obj_labels[b][o_idx],
            size=image_sizes[b],
        ))
    return detections


# ---------------------------------- main --------------------------------------

if __name__ == "__main__":
    key = jax.random.PRNGKey(0)
    k_img, k_par = jax.random.split(key)

    # images: List[Tensor] in (C, H, W) -> batched NCHW here
    images = jax.random.normal(k_img, (2, 4, 16, 16), dtype=jnp.float32)
    params = init_params(k_par)

    detections = upt_forward(images, params)
    for det in detections:
        jax.block_until_ready(det["scores"])
        jax.block_until_ready(det["boxes"])
    print("KERNEL_OK")
</pallas_src>

<mosaic_0001>
module attributes {stable_mosaic.version = 11 : i64} {
  func.func @_backbone_proj_kernel(%arg0: i32, %arg1: i32, %arg2: memref<1x4x64xf32, #tpu.memory_space<vmem>>, %arg3: memref<8x4xbf16, #tpu.memory_space<vmem>>, %arg4: memref<8x1xf32, #tpu.memory_space<vmem>>, %arg5: memref<32x8xbf16, #tpu.memory_space<vmem>>, %arg6: memref<32x1xf32, #tpu.memory_space<vmem>>, %arg7: memref<1x32x64xbf16, #tpu.memory_space<vmem>>) attributes {dimension_semantics = [#tpu.dimension_semantics<parallel>, #tpu.dimension_semantics<parallel>], iteration_bounds = array<i64: 2, 1>, scalar_prefetch = 0 : i64, scratch_operands = 0 : i64, tpu.core_type = #tpu.core_type<tc>, window_params = [{transform_indices = @transform_0, window_bounds = array<i64: 1, 4, 64>}, {pipeline_mode = #tpu.pipeline_mode<synchronous>, transform_indices = @transform_1, window_bounds = array<i64: 8, 4>}, {pipeline_mode = #tpu.pipeline_mode<synchronous>, transform_indices = @transform_2, window_bounds = array<i64: 8, 1>}, {pipeline_mode = #tpu.pipeline_mode<synchronous>, transform_indices = @transform_3, window_bounds = array<i64: 32, 8>}, {pipeline_mode = #tpu.pipeline_mode<synchronous>, transform_indices = @transform_4, window_bounds = array<i64: 32, 1>}, {transform_indices = @transform_5, window_bounds = array<i64: 1, 32, 64>}]} {
    %c0 = arith.constant 0 : index
    %c0_0 = arith.constant 0 : index
    %c0_1 = arith.constant 0 : index
    %0 = vector.load %arg2[%c0, %c0_0, %c0_1] : memref<1x4x64xf32, #tpu.memory_space<vmem>>, vector<1x4x64xf32>
    %1 = vector.shape_cast %0 : vector<1x4x64xf32> to vector<4x64xf32>
    %2 = arith.truncf %1 : vector<4x64xf32> to vector<4x64xbf16>
    %c0_2 = arith.constant 0 : index
    %c0_3 = arith.constant 0 : index
    %3 = vector.load %arg3[%c0_2, %c0_3] : memref<8x4xbf16, #tpu.memory_space<vmem>>, vector<8x4xbf16>
    %cst = arith.constant dense<0.000000e+00> : vector<8x64xf32>
    %4 = tpu.matmul %3, %2, %cst {dimension_numbers = #tpu.dot_dimension_numbers<[1], [0], [0], [1], [0, 0, 1, 1], [], []>} : vector<8x4xbf16>, vector<4x64xbf16>, vector<8x64xf32> -> vector<8x64xf32>
    %c0_4 = arith.constant 0 : index
    %c0_5 = arith.constant 0 : index
    %5 = vector.load %arg4[%c0_4, %c0_5] : memref<8x1xf32, #tpu.memory_space<vmem>>, vector<8x1xf32>
    %6 = vector.broadcast %5 : vector<8x1xf32> to vector<8x64xf32>
    %7 = arith.addf %4, %6 : vector<8x64xf32>
    %cst_6 = arith.constant 0.000000e+00 : f32
    %8 = vector.broadcast %cst_6 : f32 to vector<8x64xf32>
    %9 = arith.maximumf %7, %8 : vector<8x64xf32>
    %10 = arith.truncf %9 : vector<8x64xf32> to vector<8x64xbf16>
    %c0_7 = arith.constant 0 : index
    %c0_8 = arith.constant 0 : index
    %11 = vector.load %arg5[%c0_7, %c0_8] : memref<32x8xbf16, #tpu.memory_space<vmem>>, vector<32x8xbf16>
    %cst_9 = arith.constant dense<0.000000e+00> : vector<32x64xf32>
    %12 = tpu.matmul %11, %10, %cst_9 {dimension_numbers = #tpu.dot_dimension_numbers<[1], [0], [0], [1], [0, 0, 1, 1], [], []>} : vector<32x8xbf16>, vector<8x64xbf16>, vector<32x64xf32> -> vector<32x64xf32>
    %c0_10 = arith.constant 0 : index
    %c0_11 = arith.constant 0 : index
    %13 = vector.load %arg6[%c0_10, %c0_11] : memref<32x1xf32, #tpu.memory_space<vmem>>, vector<32x1xf32>
    %14 = vector.broadcast %13 : vector<32x1xf32> to vector<32x64xf32>
    %15 = arith.addf %12, %14 : vector<32x64xf32>
    %16 = arith.truncf %15 : vector<32x64xf32> to vector<32x64xbf16>
    %c0_12 = arith.constant 0 : index
    %c0_13 = arith.constant 0 : index
    %c0_14 = arith.constant 0 : index
    %17 = vector.load %arg7[%c0_12, %c0_13, %c0_14] : memref<1x32x64xbf16, #tpu.memory_space<vmem>>, vector<1x32x64xbf16>
    %18 = vector.shape_cast %17 : vector<1x32x64xbf16> to vector<32x64xbf16>
    %19 = vector.shape_cast %16 : vector<32x64xbf16> to vector<1x32x64xbf16>
    tpu.vector_store %arg7[%c0_12, %c0_13, %c0_14], %19 {strides = array<i32>} : memref<1x32x64xbf16, #tpu.memory_space<vmem>>, vector<1x32x64xbf16>,
    return
  }
  func.func @transform_0(%arg0: i32, %arg1: i32) -> (i32, i32, i32) {
    %c0_i32 = arith.constant 0 : i32
    %c0_i32_0 = arith.constant 0 : i32
    return %arg0, %c0_i32, %arg1 : i32, i32, i32
  }
  func.func @transform_1(%arg0: i32, %arg1: i32) -> (i32, i32) {
    %c0_i32 = arith.constant 0 : i32
    %c0_i32_0 = arith.constant 0 : i32
    %c0_i32_1 = arith.constant 0 : i32
    return %c0_i32, %c0_i32_0 : i32, i32
  }
  func.func @transform_2(%arg0: i32, %arg1: i32) -> (i32, i32) {
    %c0_i32 = arith.constant 0 : i32
    %c0_i32_0 = arith.constant 0 : i32
    %c0_i32_1 = arith.constant 0 : i32
    return %c0_i32, %c0_i32_0 : i32, i32
  }
  func.func @transform_3(%arg0: i32, %arg1: i32) -> (i32, i32) {
    %c0_i32 = arith.constant 0 : i32
    %c0_i32_0 = arith.constant 0 : i32
    %c0_i32_1 = arith.constant 0 : i32
    return %c0_i32, %c0_i32_0 : i32, i32
  }
  func.func @transform_4(%arg0: i32, %arg1: i32) -> (i32, i32) {
    %c0_i32 = arith.constant 0 : i32
    %c0_i32_0 = arith.constant 0 : i32
    %c0_i32_1 = arith.constant 0 : i32
    return %c0_i32, %c0_i32_0 : i32, i32
  }
  func.func @transform_5(%arg0: i32, %arg1: i32) -> (i32, i32, i32) {
    %c0_i32 = arith.constant 0 : i32
    %c0_i32_0 = arith.constant 0 : i32
    return %arg0, %c0_i32, %arg1 : i32, i32, i32
  }
}

</mosaic_0001>

<llo_original>
// kernel: tpu_custom_call.1
$region0: #{tpu_custom_call.1}
  #allocation0 [shape = 'u32[]', space=smem, size = 0x4, offset = 0x4, fixed_abs, tag = 'smem constant byte address 0x4 - core index']
  #allocation1 [shape = 'u32[144,128]{1,0:T(1,128)}', space=vmem, size = 0x12000, scoped, tag = 'internal scratch']
  %s0 = inlined_call_operand.vmem [shape: f32[2,4,64], index: 0, kind: input, shape index: {}]
  %s1 = inlined_call_operand.vmem [shape: bf16[8,4], index: 1, kind: input, shape index: {}]
  %s2 = inlined_call_operand.vmem [shape: f32[8,1], index: 2, kind: input, shape index: {}]
  %s3 = inlined_call_operand.vmem [shape: bf16[32,8], index: 3, kind: input, shape index: {}]
  %s4 = inlined_call_operand.vmem [shape: f32[32,1], index: 4, kind: input, shape index: {}]
  %s5 = inlined_call_operand.hbm [shape: bf16[2,32,64], index: 5, kind: output, shape index: {}]
  %s6 = sld [smem:[#allocation0]]
  $region53: #{tpu_custom_call.1} parent=0
    _
  %s8 = ssub.s32 1, %s6
  %s9 = scalar_select 0, %s8, %s6
  $region1: #{tpu_custom_call.1} parent=0
    #allocation2 [shape = 'u8[16384]{0}', space=vmem, size = 0x4000, scoped, tag = 'output window, operand 0']
    #allocation3 [shape = 's32[2]{0}', space=sflag, size = 0x8, scoped, tag = 'scoped memory for tpu_custom_call.1']
    %10 = vsyncpa [#allocation3], 0
    %s11 = scalar_lea.sflag [#allocation3], 1
    %12 = vsyncpa %s11, 0
    loop: start=0, step=1, limit=4
    $region2: #{tpu_custom_call.1} parent=1 // loop_pre_header
      _
    $region3: #{tpu_custom_call.1} parent=1 // loop_header
      %s14 = sphi 0, %s18
      %p15 = scmp.ge.s32.totalorder %s14, 4
      %s21 = sphi 0, %s33
      %s22 = sphi 0, %s29
      %s23 = sphi 0, %s21
      %s24 = sphi 0, %s22
      %s25 = sphi 0, %s23
      %s26 = sphi 0, %s24
      %s38 = sphi 0, %s40
      %s41 = sphi 0, %s38
      %s42 = sphi 0, %s41
      %s58 = sphi 0, %s42
      %s62 = sphi 0, %s62
      %s64 = sphi 0, %s62
      %s65 = sphi 0, %s64
      %s79 = sphi 0, %s65
      %s83 = sphi 0, %s83
      %s85 = sphi 0, %s83
      %s86 = sphi 0, %s85
      %s100 = sphi 0, %s86
      %s104 = sphi 0, %s104
      %s106 = sphi 0, %s104
      %s107 = sphi 0, %s106
      %s121 = sphi 0, %s107
      %s125 = sphi 0, %s125
      %s127 = sphi 0, %s125
      %s128 = sphi 0, %s127
      %s142 = sphi 0, %s128
      %s150 = sphi 0, %s152
      %s153 = sphi 0, %s150
      %s154 = sphi 0, %s153
      %s170 = sphi 0, %s154
    $region4: #{tpu_custom_call.1} parent=1 // loop_header_branch
      %17 = sbr.rel (%p15) target = $region8
    $region5: #{tpu_custom_call.1} parent=1 // loop_body
      %s19 = ssub.s32 %s14, 1
      %s20 = ssub.s32 %s14, 2
      %s27 = sadd.s32 1, %s22
      %p28 = scmp.ge.s32.totalorder %s27, 1
      %s29 = scalar_select %p28, 0, %s27
      %s30 = sadd.s32 1, %s21
      %s31 = scalar_select %p28, %s30, %s21
      %p32 = scmp.ge.s32.totalorder %s31, 2
      %s33 = scalar_select %p32, 0, %s31
      %s34 = ssub.s32 %s21, %s33
      %s35 = ssub.s32 %s22, %s29
      %s36 = sor.u32 %s34, %s35
      %p37 = scmp.eq.s32.totalorder %s36, 0
      %s39 = sadd.s32 %s38, 1
      %s40 = scalar_select %p37, %s38, %s39
      %p43 = pneg %p37
      %p44 = scmp.eq.s32.totalorder %s14, 1
      %p45 = por %p43, %p44
      %p46 = scmp.ne.s32.totalorder %s38, %s41
      %p47 = scmp.eq.s32.totalorder %s14, 0
      %p48 = por %p46, %p47
      %p49 = scmp.ne.s32.totalorder %s38, %s41
      %p50 = scmp.eq.s32.totalorder %s19, 1
      %p51 = por %p49, %p50
      %p52 = scmp.ne.s32.totalorder %s41, %s42
      %p53 = scmp.eq.s32.totalorder %s19, 0
      %p54 = por %p52, %p53
      %p55 = scmp.ne.s32.totalorder %s41, %s42
      %p56 = scmp.eq.s32.totalorder %s20, 1
      %p57 = por %p55, %p56
      %p59 = scmp.ne.s32.totalorder %s42, %s58
      %p60 = scmp.eq.s32.totalorder %s20, 0
      %p61 = por %p59, %p60
      %s63 = sadd.s32 %s62, 1
      %p66 = scmp.eq.s32.totalorder %s14, 1
      %p67 = scmp.ne.s32.totalorder %s62, %s64
      %p68 = scmp.eq.s32.totalorder %s14, 0
      %p69 = por %p67, %p68
      %p70 = scmp.ne.s32.totalorder %s62, %s64
      %p71 = scmp.eq.s32.totalorder %s19, 1
      %p72 = por %p70, %p71
      %p73 = scmp.ne.s32.totalorder %s64, %s65
      %p74 = scmp.eq.s32.totalorder %s19, 0
      %p75 = por %p73, %p74
      %p76 = scmp.ne.s32.totalorder %s64, %s65
      %p77 = scmp.eq.s32.totalorder %s20, 1
      %p78 = por %p76, %p77
      %p80 = scmp.ne.s32.totalorder %s65, %s79
      %p81 = scmp.eq.s32.totalorder %s20, 0
      %p82 = por %p80, %p81
      %s84 = sadd.s32 %s83, 1
      %p87 = scmp.eq.s32.totalorder %s14, 1
      %p88 = scmp.ne.s32.totalorder %s83, %s85
      %p89 = scmp.eq.s32.totalorder %s14, 0
      %p90 = por %p88, %p89
      %p91 = scmp.ne.s32.totalorder %s83, %s85
      %p92 = scmp.eq.s32.totalorder %s19, 1
      %p93 = por %p91, %p92
      %p94 = scmp.ne.s32.totalorder %s85, %s86
      %p95 = scmp.eq.s32.totalorder %s19, 0
      %p96 = por %p94, %p95
      %p97 = scmp.ne.s32.totalorder %s85, %s86
      %p98 = scmp.eq.s32.totalorder %s20, 1
      %p99 = por %p97, %p98
      %p101 = scmp.ne.s32.totalorder %s86, %s100
      %p102 = scmp.eq.s32.totalorder %s20, 0
      %p103 = por %p101, %p102
      %s105 = sadd.s32 %s104, 1
      %p108 = scmp.eq.s32.totalorder %s14, 1
      %p109 = scmp.ne.s32.totalorder %s104, %s106
      %p110 = scmp.eq.s32.totalorder %s14, 0
      %p111 = por %p109, %p110
      %p112 = scmp.ne.s32.totalorder %s104, %s106
      %p113 = scmp.eq.s32.totalorder %s19, 1
      %p114 = por %p112, %p113
      %p115 = scmp.ne.s32.totalorder %s106, %s107
      %p116 = scmp.eq.s32.totalorder %s19, 0
      %p117 = por %p115, %p116
      %p118 = scmp.ne.s32.totalorder %s106, %s107
      %p119 = scmp.eq.s32.totalorder %s20, 1
      %p120 = por %p118, %p119
      %p122 = scmp.ne.s32.totalorder %s107, %s121
      %p123 = scmp.eq.s32.totalorder %s20, 0
      %p124 = por %p122, %p123
      %s126 = sadd.s32 %s125, 1
      %p129 = scmp.eq.s32.totalorder %s14, 1
      %p130 = scmp.ne.s32.totalorder %s125, %s127
      %p131 = scmp.eq.s32.totalorder %s14, 0
      %p132 = por %p130, %p131
      %p133 = scmp.ne.s32.totalorder %s125, %s127
      %p134 = scmp.eq.s32.totalorder %s19, 1
      %p135 = por %p133, %p134
      %p136 = scmp.ne.s32.totalorder %s127, %s128
      %p137 = scmp.eq.s32.totalorder %s19, 0
      %p138 = por %p136, %p137
      %p139 = scmp.ne.s32.totalorder %s127, %s128
      %p140 = scmp.eq.s32.totalorder %s20, 1
      %p141 = por %p139, %p140
      %p143 = scmp.ne.s32.totalorder %s128, %s142
      %p144 = scmp.eq.s32.totalorder %s20, 0
      %p145 = por %p143, %p144
      %s146 = ssub.s32 %s21, %s33
      %s147 = ssub.s32 %s22, %s29
      %s148 = sor.u32 %s146, %s147
      %p149 = scmp.eq.s32.totalorder %s148, 0
      %s151 = sadd.s32 %s150, 1
      %s152 = scalar_select %p149, %s150, %s151
      %p155 = pneg %p149
      %p156 = scmp.eq.s32.totalorder %s14, 1
      %p157 = por %p155, %p156
      %p158 = scmp.ne.s32.totalorder %s150, %s153
      %p159 = scmp.eq.s32.totalorder %s14, 0
      %p160 = por %p158, %p159
      %p161 = scmp.ne.s32.totalorder %s150, %s153
      %p162 = scmp.eq.s32.totalorder %s19, 1
      %p163 = por %p161, %p162
      %p164 = scmp.ne.s32.totalorder %s153, %s154
      %p165 = scmp.eq.s32.totalorder %s19, 0
      %p166 = por %p164, %p165
      %p167 = scmp.ne.s32.totalorder %s153, %s154
      %p168 = scmp.eq.s32.totalorder %s20, 1
      %p169 = por %p167, %p168
      %p171 = scmp.ne.s32.totalorder %s154, %s170
      %p172 = scmp.eq.s32.totalorder %s20, 0
      %p173 = por %p171, %p172
      %p174 = scmp.le.s32.totalorder 1, %s14
      %p175 = scmp.lt.s32.totalorder %s14, 3
      %p176 = pnand %p174, %p175
      %p177 = pneg %p176
      // Predicated region
      $region9: #{tpu_custom_call.1} parent=5 // pred_check
        _
      $region10: #{tpu_custom_call.1} parent=5 // pred_check_branch
        %179 = sbr.rel (%p176) target = $region12
      $region11: #{tpu_custom_call.1} parent=5 // pred_region
        %s180 = ssub.s32 %s14, 1
        // Predicated region
        $region13: #{tpu_custom_call.1} parent=11 // pred_check
          %p181 = pneg %p75
        $region14: #{tpu_custom_call.1} parent=11 // pred_check_branch
          %183 = sbr.rel (%p181) target = $region16
        $region15: #{tpu_custom_call.1} parent=11 // pred_region
          _
        $region16: #{tpu_custom_call.1} parent=11 // pred_fallthru
          _
        // Predicated region
        $region17: #{tpu_custom_call.1} parent=11 // pred_check
          %p184 = pneg %p96
        $region18: #{tpu_custom_call.1} parent=11 // pred_check_branch
          %186 = sbr.rel (%p184) target = $region20
        $region19: #{tpu_custom_call.1} parent=11 // pred_region
          _
        $region20: #{tpu_custom_call.1} parent=11 // pred_fallthru
          _
        // Predicated region
        $region21: #{tpu_custom_call.1} parent=11 // pred_check
          %p187 = pneg %p117
        $region22: #{tpu_custom_call.1} parent=11 // pred_check_branch
          %189 = sbr.rel (%p187) target = $region24
        $region23: #{tpu_custom_call.1} parent=11 // pred_region
          _
        $region24: #{tpu_custom_call.1} parent=11 // pred_fallthru
          _
        // Predicated region
        $region25: #{tpu_custom_call.1} parent=11 // pred_check
          %p190 = pneg %p138
        $region26: #{tpu_custom_call.1} parent=11 // pred_check_branch
          %192 = sbr.rel (%p190) target = $region28
        $region27: #{tpu_custom_call.1} parent=11 // pred_region
          _
        $region28: #{tpu_custom_call.1} parent=11 // pred_fallthru
          _
      $region12: #{tpu_custom_call.1} parent=5 // pred_fallthru
        _
      %p193 = scmp.lt.s32.totalorder %s14, 2
      // Predicated region
      $region29: #{tpu_custom_call.1} parent=5 // pred_check
        %p194 = pneg %p193
      $region30: #{tpu_custom_call.1} parent=5 // pred_check_branch
        %196 = sbr.rel (%p194) target = $region32
      $region31: #{tpu_custom_call.1} parent=5 // pred_region
        // Predicated region
        $region33: #{tpu_custom_call.1} parent=31 // pred_check
          %p197 = pneg %p48
        $region34: #{tpu_custom_call.1} parent=31 // pred_check_branch
          %199 = sbr.rel (%p197) target = $region36
        $region35: #{tpu_custom_call.1} parent=31 // pred_region
          %p200 = scmp.lt.s32.totalorder %s21, 1
          %s201 = scalar_select %p200, %s21, 1
          %p202 = scmp.lt.s32.totalorder %s22, 0
          %s203 = scalar_select %p202, %s22, 0
          %s204 = sadd.s32 %s203, %s201
          %s205 = smul.addr %s204, 4
          %s206 = scalar_lea.vmem %s0, %s205
        $region36: #{tpu_custom_call.1} parent=31 // pred_fallthru
          _
      $region32: #{tpu_custom_call.1} parent=5 // pred_fallthru
        _
      %p207 = scmp.le.s32.totalorder 1, %s14
      %p208 = scmp.lt.s32.totalorder %s14, 3
      %p209 = pnand %p207, %p208
      %p210 = pneg %p209
      // Predicated region
      $region37: #{tpu_custom_call.1} parent=5 // pred_check
        _
      $region38: #{tpu_custom_call.1} parent=5 // pred_check_branch
        %212 = sbr.rel (%p209) target = $region40
      $region39: #{tpu_custom_call.1} parent=5 // pred_region
        %s213 = ssub.s32 %s14, 1
        %p214 = scmp.lt.s32.totalorder %s23, 1
        %s215 = scalar_select %p214, %s23, 1
        %p216 = scmp.lt.s32.totalorder %s24, 0
        %s217 = scalar_select %p216, %s24, 0
        %s218 = sadd.s32 %s217, %s215
        %s219 = smul.addr %s218, 4
        %s220 = scalar_lea.vmem %s0, %s219
        %p221 = pneg %p54
        %p222 = pneg %p51
        %p223 = pneg %p75
        %p224 = pneg %p72
        %p225 = pneg %p96
        %p226 = pneg %p93
        %p227 = pneg %p117
        %p228 = pneg %p114
        %p229 = pneg %p138
        %p230 = pneg %p135
        %p231 = pneg %p166
        %p232 = pneg %p163
        %s233 = sand.u32 %s153, 1
        %s234 = scalar_lea.sflag [#allocation3], %s233
        %s235 = sand.u32 %s153, 1
        %s236 = smul.addr %s235, 16
        %s237 = scalar_lea.vmem [#allocation2], %s236
        %p238 = scmp.lt.s32.totalorder %s23, 1
        %s239 = scalar_select %p238, %s23, 1
        %p240 = scmp.lt.s32.totalorder %s24, 0
        %s241 = scalar_select %p240, %s24, 0
        %s242 = sadd.s32 %s241, %s239
        %s243 = smul.addr %s242, 4
        %s244 = scalar_lea.vmem %s0, %s243
        %v246 = vld [vmem:[%s244] sm:$0xf]
        %v247 = vpack.c.bf16 %v246, %v246
        %v248 = vld [vmem:[%s1] sm:$0xf]
        %v249 = vld [vmem:[%s2] sm:$0xff]
        %251 = vset.pattern.permute.xlu0 0
        %252 = vperm.xlu0 %251, %v249
        %v253 = vpop.permute.xlu0 %252
        %vm255 = vcmask 31744
        %v257 = vsel %vm255, %v248, 0
        %vm259 = vcmask 1041408
        %v261 = vsel %vm259, %v247, 0
        %263 = vmatprep.subr.bf16.mxu0 0
        %264 = vmatpush1.bf16.msra.mxu0 %v261
        %265 = vmatprep.subr.bf16.mxu0 0
        %266 = vmatpush1.bf16.msra.mxu0 0
        %267 = vmatprep.subr.bf16.mxu0 0
        %268 = vmatpush1.bf16.msra.mxu0 0
        %269 = vmatprep.subr.bf16.mxu0 0
        %270 = vmatpush1.bf16.msra.mxu0 0
        %271 = vmatprep.subr.bf16.mxu0 0
        %272 = vmatpush1.bf16.msra.mxu0 0
        %273 = vmatprep.subr.bf16.mxu0 0
        %274 = vmatpush1.bf16.msra.mxu0 0
        %275 = vmatprep.subr.bf16.mxu0 0
        %276 = vmatpush1.bf16.msra.mxu0 0
        %277 = vmatprep.subr.bf16.mxu0 0
        %278 = vmatpush1.bf16.msra.mxu0 0
        %279 = vmatprep.subr.bf16.mxu0 0
        %280 = vmatpush1.bf16.msra.mxu0 0
        %281 = vmatprep.subr.bf16.mxu0 0
        %282 = vmatpush1.bf16.msra.mxu0 0
        %283 = vmatprep.subr.bf16.mxu0 0
        %284 = vmatpush1.bf16.msra.mxu0 0
        %285 = vmatprep.subr.bf16.mxu0 0
        %286 = vmatpush1.bf16.msra.mxu0 0
        %287 = vmatprep.subr.bf16.mxu0 0
        %288 = vmatpush1.bf16.msra.mxu0 0
        %289 = vmatprep.subr.bf16.mxu0 0
        %290 = vmatpush1.bf16.msra.mxu0 0
        %291 = vmatprep.subr.bf16.mxu0 0
        %292 = vmatpush1.bf16.msra.mxu0 0
        %293 = vmatprep.subr.bf16.mxu0 0
        %294 = vmatpush1.bf16.msra.mxu0 0
        %295 = vmatprep.mubr.bf16.mxu0 0
        %296 = vmatmul.mubr.bf16.gmra.mrb[0].mxu0 %v257
        %v297 = vpop.f32.mrb[0].mxu0
        %v298 = vadd.f32 %v253, %v297
        %v299 = vpop.f32.mrb[0].mxu0
        %v300 = vpop.f32.mrb[0].mxu0
        %v301 = vpop.f32.mrb[0].mxu0
        %302 = vdwg.mxu0
        %v303 = vmax.f32 %v298, 0.0
        %v304 = vpack.c.bf16 %v303, %v303
        %v305 = vld [vmem:[%s3] sm:$0xf]
        %v306 = vld [vmem:[%s3 + $0x4] sm:$0xf]
        %v307 = vld [vmem:[%s3 + $0x8] sm:$0xf]
        %v308 = vld [vmem:[%s3 + $0xc] sm:$0xf]
        %v309 = vld [vmem:[%s4] sm:$0xff]
        %v310 = vld [vmem:[%s4 + $0x8] sm:$0xff]
        %v311 = vld [vmem:[%s4 + $0x10] sm:$0xff]
        %v312 = vld [vmem:[%s4 + $0x18] sm:$0xff]
        %314 = vset.pattern.permute.xlu0 0
        %315 = vperm.xlu0 %314, %v309
        %v316 = vpop.permute.xlu0 %315
        %319 = vset.pattern.permute.xlu0 0
        %320 = vperm.xlu0 %319, %v310
        %v321 = vpop.permute.xlu0 %320
        %324 = vset.pattern.permute.xlu0 0
        %325 = vperm.xlu0 %324, %v311
        %v326 = vpop.permute.xlu0 %325
        %329 = vset.pattern.permute.xlu0 0
        %330 = vperm.xlu0 %329, %v312
        %v331 = vpop.permute.xlu0 %330
        %v337 = vunpack.c.l.b16 %v305
        %v338 = vunpack.c.l.b16 %v306
        %v339 = vunpack.c.l.b16 %v307
        %v340 = vunpack.c.l.b16 %v308
        %v341 = vpack.c.b16 %v338, %v337
        %v342 = vpack.c.b16 %v340, %v339
        %vm343 = vcmask 64512
        %v345 = vsel %vm343, %v341, 0
        %v348 = vsel %vm343, %v342, 0
        %vm350 = vcmask 1043456
        %v352 = vsel %vm350, %v304, 0
        %354 = vmatprep.subr.bf16.mxu0 0
        %355 = vmatpush1.bf16.msra.mxu0 %v352
        %356 = vmatprep.subr.bf16.mxu0 0
        %357 = vmatpush1.bf16.msra.mxu0 0
        %358 = vmatprep.subr.bf16.mxu0 0
        %359 = vmatpush1.bf16.msra.mxu0 0
        %360 = vmatprep.subr.bf16.mxu0 0
        %361 = vmatpush1.bf16.msra.mxu0 0
        %362 = vmatprep.subr.bf16.mxu0 0
        %363 = vmatpush1.bf16.msra.mxu0 0
        %364 = vmatprep.subr.bf16.mxu0 0
        %365 = vmatpush1.bf16.msra.mxu0 0
        %366 = vmatprep.subr.bf16.mxu0 0
        %367 = vmatpush1.bf16.msra.mxu0 0
        %368 = vmatprep.subr.bf16.mxu0 0
        %369 = vmatpush1.bf16.msra.mxu0 0
        %370 = vmatprep.subr.bf16.mxu0 0
        %371 = vmatpush1.bf16.msra.mxu0 0
        %372 = vmatprep.subr.bf16.mxu0 0
        %373 = vmatpush1.bf16.msra.mxu0 0
        %374 = vmatprep.subr.bf16.mxu0 0
        %375 = vmatpush1.bf16.msra.mxu0 0
        %376 = vmatprep.subr.bf16.mxu0 0
        %377 = vmatpush1.bf16.msra.mxu0 0
        %378 = vmatprep.subr.bf16.mxu0 0
        %379 = vmatpush1.bf16.msra.mxu0 0
        %380 = vmatprep.subr.bf16.mxu0 0
        %381 = vmatpush1.bf16.msra.mxu0 0
        %382 = vmatprep.subr.bf16.mxu0 0
        %383 = vmatpush1.bf16.msra.mxu0 0
        %384 = vmatprep.subr.bf16.mxu0 0
        %385 = vmatpush1.bf16.msra.mxu0 0
        %386 = vmatprep.mubr.bf16.mxu0 0
        %387 = vmatmul.mubr.bf16.gmra.mrb[0].mxu0 %v345
        %v388 = vpop.f32.mrb[0].mxu0
        %v389 = vadd.f32 %v316, %v388
        %v390 = vpop.f32.mrb[0].mxu0
        %v391 = vpop.f32.mrb[0].mxu0
        %v392 = vadd.f32 %v321, %v391
        %v393 = vpop.f32.mrb[0].mxu0
        %394 = vmatprep.mubr.bf16.mxu0 0
        %395 = vmatmul.mubr.bf16.gmra.mrb[0].mxu0 %v348
        %v396 = vpop.f32.mrb[0].mxu0
        %v397 = vadd.f32 %v326, %v396
        %v398 = vpop.f32.mrb[0].mxu0
        %v399 = vpop.f32.mrb[0].mxu0
        %v400 = vadd.f32 %v331, %v399
        %v401 = vpop.f32.mrb[0].mxu0
        %402 = vdwg.mxu0
        %v403 = vpack.c.bf16 %v392, %v389
        %v404 = vpack.c.bf16 %v400, %v397
        %v407 = vunpack.c.l.b16 %v403
        %v408 = vunpack.c.h.b16 %v403
        %v409 = vunpack.c.l.b16 %v404
        %v410 = vunpack.c.h.b16 %v404
        %v411 = vpack.c.b16 %v407, %v407
        %v412 = vpack.c.b16 %v408, %v408
        %v413 = vpack.c.b16 %v409, %v409
        %v414 = vpack.c.b16 %v410, %v410
        %vm419 = vcmask 519168
        %420 = vst.msk [vmem:[%s237] sm:$0xf] %vm419, %v411
        %421 = vst.msk [vmem:[%s237 + $0x4] sm:$0xf] %vm419, %v412
        %422 = vst.msk [vmem:[%s237 + $0x8] sm:$0xf] %vm419, %v413
        %423 = vst.msk [vmem:[%s237 + $0xc] sm:$0xf] %vm419, %v414
        %s424 = sand.u32 %s153, 1
        %s425 = scalar_lea.sflag [#allocation3], %s424
        %s426 = sand.u32 %s153, 1
        %s427 = smul.addr %s426, 16
        %s428 = scalar_lea.vmem [#allocation2], %s427
        // Predicated region
        $region41: #{tpu_custom_call.1} parent=39 // pred_check
          %p429 = pneg %p163
        $region42: #{tpu_custom_call.1} parent=39 // pred_check_branch
          %431 = sbr.rel (%p429) target = $region44
        $region43: #{tpu_custom_call.1} parent=39 // pred_region
          %s433 = ssub.s32 256, 256
          %434 = vsyncadd %s425, %s433
          %s435 = smul.addr %s23, 4
          %s436 = sadd.s32 %s24, %s435
          %s437 = smul.addr %s436, 64
          %s438 = scalar_lea.hbm %s5, %s437
          %s439 = sshll.u32 %s428, 4
          %s440 = int_to_ptr.vmem [resolvable:$true] %s439
          %445 = dma.vmem_to_hbm [thread:$0]  %s440, 256, %s438, %s425, 64, 64, 4
        $region44: #{tpu_custom_call.1} parent=39 // pred_fallthru
          _
      $region40: #{tpu_custom_call.1} parent=5 // pred_fallthru
        _
      %p446 = scmp.le.s32.totalorder 2, %s14
      // Predicated region
      $region45: #{tpu_custom_call.1} parent=5 // pred_check
        %p447 = pneg %p446
      $region46: #{tpu_custom_call.1} parent=5 // pred_check_branch
        %449 = sbr.rel (%p447) target = $region48
      $region47: #{tpu_custom_call.1} parent=5 // pred_region
        %s450 = ssub.s32 %s14, 2
        // Predicated region
        $region49: #{tpu_custom_call.1} parent=47 // pred_check
          %p451 = pneg %p169
        $region50: #{tpu_custom_call.1} parent=47 // pred_check_branch
          %453 = sbr.rel (%p451) target = $region52
        $region51: #{tpu_custom_call.1} parent=47 // pred_region
          %s454 = sand.u32 %s154, 1
          %s455 = scalar_lea.sflag [#allocation3], %s454
          %s456 = sand.u32 %s154, 1
          %s457 = smul.addr %s456, 16
          %s458 = scalar_lea.vmem [#allocation2], %s457
          %459 = dma.done %s455, 256
        $region52: #{tpu_custom_call.1} parent=47 // pred_fallthru
          _
      $region48: #{tpu_custom_call.1} parent=5 // pred_fallthru
        _
    $region6: #{tpu_custom_call.1} parent=1 // loop_footer
      %s18 = sadd.s32 1, %s14
    $region7: #{tpu_custom_call.1} parent=1 // loop_footer_branch
      %13 = sbr.rel target = $region3
    $region8: #{tpu_custom_call.1} parent=1 // loop_exit
      _
    %460 = vsyncpa [#allocation3], 1
    %s461 = scalar_lea.sflag [#allocation3], 1
    %462 = vsyncpa %s461, 1

</llo_original>
